<compile_context>
chip_gen: v6e
topology: v6e:2x2x1
jax: 0.10.0
libtpu: 0.0.40
codegen_flags: <defaults>
</compile_context>

<pallas_src>
import functools

import jax
import jax.numpy as jnp
from jax import lax
from jax.experimental import pallas as pl
from jax.experimental.pallas import tpu as pltpu

_LANE = 128


def _min_sublanes(dtype) -> int:
    """Minimum sublane multiple for a dtype's TPU tiling."""
    itemsize = jnp.dtype(dtype).itemsize
    if itemsize >= 4:
        return 8
    if itemsize == 2:
        return 16
    return 32  # int8 / uint8 / fp8


def _sse_kernel(a_ref, b_ref, o_ref, *, block_rows, valid_rows, needs_mask):
    """Per-block squared-error partial sum, shape (8, 128)."""
    a = a_ref[...].astype(jnp.float32)
    b = b_ref[...].astype(jnp.float32)
    d = a - b
    sq = d * d
    if needs_mask:
        # Ragged last block: rows past `valid_rows` hold unspecified data.
        row = pl.program_id(0) * block_rows + lax.broadcasted_iota(
            jnp.int32, (block_rows, _LANE), 0
        )
        sq = jnp.where(row < valid_rows, sq, 0.0)
    # (block_rows, 128) -> (block_rows//8, 8, 128) matches the VMEM tiling
    # (no data movement); summing over axis 0 is pure VPU vreg adds.
    o_ref[0] = jnp.sum(sq.reshape(block_rows // 8, 8, _LANE), axis=0)


def psnr_pallas(img1, img2, data_range=255.0, block_bytes=1 << 20):
    """PSNR(img1, img2) with the squared-error reduction done in Pallas."""
    assert img1.shape == img2.shape
    n = int(img1.size)
    dr = jnp.float32(data_range)

    a = jnp.ravel(img1)
    b = jnp.ravel(img2)

    sub = max(_min_sublanes(img1.dtype), _min_sublanes(img2.dtype))
    itemsize = max(jnp.dtype(img1.dtype).itemsize, jnp.dtype(img2.dtype).itemsize)

    if n < sub * _LANE:
        # Tiny input: a kernel launch is pure overhead; do it in plain JAX.
        sse = jnp.sum((a.astype(jnp.float32) - b.astype(jnp.float32)) ** 2)
        return 10.0 * jnp.log10(dr * dr * jnp.float32(n) / sse)

    rem = n % _LANE
    if rem:
        # Rare (image tensors are almost always lane-divisible): pad only to
        # the next multiple of 128; the zero padding contributes 0 to the SSE.
        pad = _LANE - rem
        a = jnp.pad(a, (0, pad))
        b = jnp.pad(b, (0, pad))
    rows = a.size // _LANE
    a = a.reshape(rows, _LANE)
    b = b.reshape(rows, _LANE)

    # ~1 MiB per input per pipeline buffer, independent of dtype
    # (f32 -> 2048 rows, bf16 -> 4096, uint8 -> 8192). 2 inputs x 2 buffers
    # = 4 MiB of VMEM: safe under v5e's 16 MiB / v7x's 32 MiB scoped defaults.
    target_rows = max(sub, (block_bytes // (_LANE * itemsize)) // sub * sub)
    block_rows = min(target_rows, (rows // sub) * sub)
    num_blocks = -(-rows // block_rows)
    needs_mask = (rows % block_rows) != 0

    kernel = functools.partial(
        _sse_kernel,
        block_rows=block_rows,
        valid_rows=rows,
        needs_mask=needs_mask,
    )

    partials = pl.pallas_call(
        kernel,
        out_shape=jax.ShapeDtypeStruct((num_blocks, 8, _LANE), jnp.float32),
        grid_spec=pltpu.PrefetchScalarGridSpec(
            num_scalar_prefetch=0,
            grid=(num_blocks,),
            in_specs=[
                pl.BlockSpec((block_rows, _LANE), lambda i: (i, 0)),
                pl.BlockSpec((block_rows, _LANE), lambda i: (i, 0)),
            ],
            out_specs=pl.BlockSpec((1, 8, _LANE), lambda i: (i, 0, 0)),
        ),
        compiler_params=pltpu.CompilerParams(
            # Independent per-block partial sums -> megacore shardable (v7x).
            dimension_semantics=("parallel",),
        ),
    )(a, b)

    sse = jnp.sum(partials)
    mse = sse / jnp.float32(n)
    # Note: mse == 0 (identical images) yields +inf, matching skimage.
    return 10.0 * jnp.log10(dr * dr / mse)


def psnr_ref(img1, img2, data_range=255.0):
    d = img1.astype(jnp.float32) - img2.astype(jnp.float32)
    mse = jnp.mean(d * d)
    return 10.0 * jnp.log10(jnp.float32(data_range) ** 2 / mse)


if __name__ == "__main__":
    key = jax.random.PRNGKey(0)

    # Test 1: canonical small NCHW f32 input (single block).
    k1, k2 = jax.random.split(key)
    shape = (2, 4, 16, 16)
    img1 = jax.random.uniform(k1, shape, jnp.float32, 0.0, 255.0)
    img2 = img1 + jax.random.normal(k2, shape, jnp.float32) * 5.0
    out = jax.block_until_ready(psnr_pallas(img1, img2))
    ref = psnr_ref(img1, img2)
    assert jnp.allclose(out, ref, rtol=1e-4, atol=1e-3), (out, ref)

    # Test 2: multi-block grid with a ragged last block (exercises masking
    # and the parallel per-block partial-sum path).
    k3, k4 = jax.random.split(k2)
    shape2 = (2, 3, 40, 40)
    a1 = jax.random.uniform(k3, shape2, jnp.float32, 0.0, 255.0)
    a2 = a1 + jax.random.normal(k4, shape2, jnp.float32) * 3.0
    out2 = jax.block_until_ready(psnr_pallas(a1, a2))
    ref2 = psnr_ref(a1, a2)
    assert jnp.allclose(out2, ref2, rtol=1e-4, atol=1e-3), (out2, ref2)

    # Test 3: bf16 inputs stay bf16 into the kernel (in-kernel widening),
    # halving HBM traffic versus a wrapper-level f32 cast.
    k5, k6 = jax.random.split(k4)
    shape3 = (2, 4, 32, 32)
    b1 = jax.random.uniform(k5, shape3, jnp.float32, 0.0, 255.0).astype(jnp.bfloat16)
    b2 = (b1.astype(jnp.float32)
          + jax.random.normal(k6, shape3, jnp.float32) * 4.0).astype(jnp.bfloat16)
    out3 = jax.block_until_ready(psnr_pallas(b1, b2))
    ref3 = psnr_ref(b1, b2)
    assert jnp.allclose(out3, ref3, rtol=1e-4, atol=1e-3), (out3, ref3)

    print("KERNEL_OK")
</pallas_src>

<mosaic_0001>
module attributes {stable_mosaic.version = 11 : i64} {
  func.func @_sse_kernel(%arg0: i32, %arg1: memref<16x128xf32, #tpu.memory_space<vmem>>, %arg2: memref<16x128xf32, #tpu.memory_space<vmem>>, %arg3: memref<1x8x128xf32, #tpu.memory_space<vmem>>) attributes {dimension_semantics = [#tpu.dimension_semantics<parallel>], iteration_bounds = array<i64: 1>, scalar_prefetch = 0 : i64, scratch_operands = 0 : i64, tpu.core_type = #tpu.core_type<tc>, window_params = [{transform_indices = @transform_0, window_bounds = array<i64: 16, 128>}, {transform_indices = @transform_1, window_bounds = array<i64: 16, 128>}, {transform_indices = @transform_2, window_bounds = array<i64: 1, 8, 128>}]} {
    %c0 = arith.constant 0 : index
    %c0_0 = arith.constant 0 : index
    %0 = vector.load %arg1[%c0, %c0_0] : memref<16x128xf32, #tpu.memory_space<vmem>>, vector<16x128xf32>
    %c0_1 = arith.constant 0 : index
    %c0_2 = arith.constant 0 : index
    %1 = vector.load %arg2[%c0_1, %c0_2] : memref<16x128xf32, #tpu.memory_space<vmem>>, vector<16x128xf32>
    %2 = arith.subf %0, %1 : vector<16x128xf32>
    %3 = arith.mulf %2, %2 : vector<16x128xf32>
    %4 = vector.shape_cast %3 : vector<16x128xf32> to vector<2x8x128xf32>
    %cst = arith.constant dense<0.000000e+00> : vector<8x128xf32>
    %5 = vector.multi_reduction <add>, %4, %cst [0] : vector<2x8x128xf32> to vector<8x128xf32>
    %c0_3 = arith.constant 0 : index
    %c0_4 = arith.constant 0 : index
    %c0_5 = arith.constant 0 : index
    %6 = vector.load %arg3[%c0_3, %c0_4, %c0_5] : memref<1x8x128xf32, #tpu.memory_space<vmem>>, vector<1x8x128xf32>
    %7 = vector.shape_cast %6 : vector<1x8x128xf32> to vector<8x128xf32>
    %8 = vector.shape_cast %5 : vector<8x128xf32> to vector<1x8x128xf32>
    tpu.vector_store %arg3[%c0_3, %c0_4, %c0_5], %8 {strides = array<i32>} : memref<1x8x128xf32, #tpu.memory_space<vmem>>, vector<1x8x128xf32>,
    return
  }
  func.func @transform_0(%arg0: i32) -> (i32, i32) {
    %c0_i32 = arith.constant 0 : i32
    %c0_i32_0 = arith.constant 0 : i32
    return %arg0, %c0_i32 : i32, i32
  }
  func.func @transform_1(%arg0: i32) -> (i32, i32) {
    %c0_i32 = arith.constant 0 : i32
    %c0_i32_0 = arith.constant 0 : i32
    return %arg0, %c0_i32 : i32, i32
  }
  func.func @transform_2(%arg0: i32) -> (i32, i32, i32) {
    %c0_i32 = arith.constant 0 : i32
    %c0_i32_0 = arith.constant 0 : i32
    %c0_i32_1 = arith.constant 0 : i32
    return %arg0, %c0_i32, %c0_i32_0 : i32, i32, i32
  }
}

</mosaic_0001>

<llo_original>
// kernel: tpu_custom_call.1
$region0: #{tpu_custom_call.1}
  #allocation0 [shape = 'u32[]', space=smem, size = 0x4, offset = 0x4, fixed_abs, tag = 'smem constant byte address 0x4 - core index']
  #allocation1 [shape = 'u32[144,128]{1,0:T(1,128)}', space=vmem, size = 0x12000, scoped, tag = 'internal scratch']
  %s0 = inlined_call_operand.hbm [shape: f32[16,128], index: 0, kind: input, shape index: {}]
  %s1 = inlined_call_operand.hbm [shape: f32[16,128], index: 1, kind: input, shape index: {}]
  %s2 = inlined_call_operand.hbm [shape: f32[1,8,128], index: 2, kind: output, shape index: {}]
  %s3 = sld [smem:[#allocation0]]
  $region26: #{tpu_custom_call.1} parent=0
    _
  %s5 = ssub.s32 1, %s3
  %s6 = scalar_select 0, %s5, %s3
  $region1: #{tpu_custom_call.1} parent=0
    #allocation2 [shape = 'u8[8192]{0}', space=vmem, size = 0x2000, scoped, tag = 'input window, operand 0, single buffered']
    #allocation3 [shape = 's32[1]{0}', space=sflag, size = 0x4, scoped, tag = 'scoped memory for tpu_custom_call.1']
    #allocation4 [shape = 's32[1]{0}', space=sflag, size = 0x4, scoped, tag = 'scoped memory for tpu_custom_call.1']
    #allocation5 [shape = 'u8[8192]{0}', space=vmem, size = 0x2000, scoped, tag = 'input window, operand 1, single buffered']
    #allocation6 [shape = 's32[1]{0}', space=sflag, size = 0x4, scoped, tag = 'scoped memory for tpu_custom_call.1']
    #allocation7 [shape = 'u8[4096]{0}', space=vmem, size = 0x1000, scoped, tag = 'output window, operand 0, single buffered']
    %7 = vsyncpa [#allocation3], 0
    %8 = vsyncpa [#allocation6], 0
    %9 = vsyncpa [#allocation4], 0
    // Predicated region
    $region2: #{tpu_custom_call.1} parent=1 // pred_check
      _
    $region3: #{tpu_custom_call.1} parent=1 // pred_check_branch
      %11 = sbr.rel (0) target = $region5
    $region4: #{tpu_custom_call.1} parent=1 // pred_region
      %s13 = ssub.s32 256, 256
      %14 = vsyncadd [#allocation3], %s13
      %s15 = sshll.u32 [#allocation2], 4
      %s16 = int_to_ptr.vmem [resolvable:$true] %s15
      %21 = dma.hbm_to_vmem [thread:$0]  %s0, 256, %s16, [#allocation3], 128, 128, 8
    $region5: #{tpu_custom_call.1} parent=1 // pred_fallthru
      _
    // Predicated region
    $region6: #{tpu_custom_call.1} parent=1 // pred_check
      _
    $region7: #{tpu_custom_call.1} parent=1 // pred_check_branch
      %23 = sbr.rel (0) target = $region9
    $region8: #{tpu_custom_call.1} parent=1 // pred_region
      %s25 = ssub.s32 256, 256
      %26 = vsyncadd [#allocation6], %s25
      %s27 = sshll.u32 [#allocation5], 4
      %s28 = int_to_ptr.vmem [resolvable:$true] %s27
      %33 = dma.hbm_to_vmem [thread:$0]  %s1, 256, %s28, [#allocation6], 128, 128, 8
    $region9: #{tpu_custom_call.1} parent=1 // pred_fallthru
      _
    // Predicated region
    $region10: #{tpu_custom_call.1} parent=1 // pred_check
      _
    $region11: #{tpu_custom_call.1} parent=1 // pred_check_branch
      %35 = sbr.rel (0) target = $region13
    $region12: #{tpu_custom_call.1} parent=1 // pred_region
      %36 = dma.done [#allocation3], 256
    $region13: #{tpu_custom_call.1} parent=1 // pred_fallthru
      _
    // Predicated region
    $region14: #{tpu_custom_call.1} parent=1 // pred_check
      _
    $region15: #{tpu_custom_call.1} parent=1 // pred_check_branch
      %38 = sbr.rel (0) target = $region17
    $region16: #{tpu_custom_call.1} parent=1 // pred_region
      %39 = dma.done [#allocation6], 256
    $region17: #{tpu_custom_call.1} parent=1 // pred_fallthru
      _
    %v40 = vld [vmem:[#allocation2] sm:$0xff]
    %v41 = vld [vmem:[#allocation2 + $0x8] sm:$0xff]
    %v42 = vld [vmem:[#allocation5] sm:$0xff]
    %v43 = vld [vmem:[#allocation5 + $0x8] sm:$0xff]
    %v44 = vsub.f32 %v40, %v42
    %v45 = vsub.f32 %v41, %v43
    %v46 = vmul.f32 %v44, %v44
    %v47 = vmul.f32 %v45, %v45
    %v48 = vadd.f32 %v46, %v47
    %49 = vst [vmem:[#allocation7] sm:$0xff] %v48
    // Predicated region
    $region18: #{tpu_custom_call.1} parent=1 // pred_check
      _
    $region19: #{tpu_custom_call.1} parent=1 // pred_check_branch
      %51 = sbr.rel (0) target = $region21
    $region20: #{tpu_custom_call.1} parent=1 // pred_region
      %s53 = ssub.s32 128, 128
      %54 = vsyncadd [#allocation4], %s53
      %s56 = sshll.u32 [#allocation7], 4
      %s57 = int_to_ptr.vmem [resolvable:$true] %s56
      %59 = dma.vmem_to_hbm [thread:$0]  %s57, 128, %s2, [#allocation4]
    $region21: #{tpu_custom_call.1} parent=1 // pred_fallthru
      _
    // Predicated region
    $region22: #{tpu_custom_call.1} parent=1 // pred_check
      _
    $region23: #{tpu_custom_call.1} parent=1 // pred_check_branch
      %61 = sbr.rel (0) target = $region25
    $region24: #{tpu_custom_call.1} parent=1 // pred_region
      %62 = dma.done [#allocation4], 128
    $region25: #{tpu_custom_call.1} parent=1 // pred_fallthru
      _
    %63 = vsyncpa [#allocation3], 1
    %64 = vsyncpa [#allocation6], 1
    %65 = vsyncpa [#allocation4], 1

</llo_original>
